<compile_context>
chip_gen: v6e
topology: v6e:2x2x1
jax: 0.10.0
libtpu: 0.0.40
codegen_flags: <defaults>
</compile_context>

<pallas_src>
import functools

import jax
import jax.numpy as jnp
from jax import lax
from jax.experimental import pallas as pl
from jax.experimental.pallas import tpu as pltpu

P = 7        # max half-window over all branches: k=3, dilation=7 -> pad 7
_N_ACC = 4   # independent accumulators to break the 65-term add chain


def _dcb_kernel(w1_ref, wt_ref, x_ref, o_ref, *, dy_groups, H, W, C, Co, NB):
    """One block (NB images, channel-packed along lanes) per grid step.

    w1_ref: SMEM (Co*C,)          1x1 pointwise weights (only 12 scalar reads)
    wt_ref: VMEM (T, NB*C*W)      merged, a[]-scaled, edge-masked tap weight slab
    x_ref : VMEM (1, Hp, Lp)      zero-padded, lane-packed input block
    o_ref : VMEM (1, H, NB*Co*W)  lane-packed output block
    """
    CPW = NB * C * W

    # --- fused depthwise stencil: 65 merged taps, all channels per VALU op ---
    accs = [jnp.zeros((H, CPW), jnp.float32) for _ in range(_N_ACC)]
    i = 0
    for dy, taps in dy_groups:                      # 11 distinct sublane shifts
        base = x_ref[0, P + dy:P + dy + H, :]       # one sublane-offset load per group
        for t, dx in taps:                          # 65 merged taps total
            w_t = wt_ref[t:t + 1, :]                # (1, CPW) lane-broadcast weights
            shifted = base[:, P + dx:P + dx + CPW]  # static lane-offset slice (XLU)
            accs[i % _N_ACC] = accs[i % _N_ACC] + w_t * shifted
            i += 1
    acc = (accs[0] + accs[1]) + (accs[2] + accs[3])
    relu = jnp.maximum(acc, 0.0)                    # ReLU on the fused mix

    # --- fused 1x1 pointwise conv: out[co] = sum_c w1[co,c] * relu[c] (VPU) ---
    segs = []
    for n in range(NB):
        chans = [relu[:, (n * C + c) * W:(n * C + c + 1) * W] for c in range(C)]
        for co in range(Co):
            s = w1_ref[co * C] * chans[0]
            for c in range(1, C):
                s = s + w1_ref[co * C + c] * chans[c]
            segs.append(s)
    o_ref[0] = jnp.concatenate(segs, axis=-1)       # one lane-packed store


def _merged_taps(a, params):
    """Merge all depthwise branches + identity + a[] scaling into one tap table.

    Returns (offsets, taps): offsets is a static list of (dy, dx); taps[t, c]
    is the combined per-channel weight of tap t.
    """
    C = params['k1d1'].shape[0]
    contrib = {}

    def add(off, vec):
        contrib[off] = contrib[off] + vec if off in contrib else vec

    def add_dw(w, d, scale):                  # w: (C, 1, k, k) depthwise weight
        k = w.shape[-1]
        half = (k - 1) // 2
        w = w[:, 0].astype(jnp.float32)
        for i in range(k):
            for j in range(k):
                add((d * (i - half), d * (j - half)), scale * w[:, i, j])

    add((0, 0), jnp.full((C,), a[0], jnp.float32))   # identity term x * a[0]
    add_dw(params['k1d1'], 1, a[1])
    add_dw(params['k3d1'], 1, a[2] + a[5])           # forward() re-uses convk3d1 (c5)
    add_dw(params['k5d1'], 1, a[3])
    add_dw(params['k7d1'], 1, a[4])
    add_dw(params['k3d5'], 5, a[6])
    add_dw(params['k3d7'], 7, a[7])

    offsets = sorted(contrib.keys())                  # sorted by (dy, dx)
    taps = jnp.stack([contrib[o] for o in offsets])   # (T, C)
    return offsets, taps


def _tap_weight_slab(offsets, taps, W, NB, C):
    """(T, NB*C*W) lane weights; the depthwise W-edge zero padding is folded in
    as a 0/1 mask so the compact channel packing needs no per-channel halo."""
    T = taps.shape[0]
    dx = jnp.array([d for (_, d) in offsets], jnp.int32)           # (T,)
    w = jnp.arange(W, dtype=jnp.int32)
    src = w[None, :] + dx[:, None]                                  # (T, W)
    valid = ((src >= 0) & (src < W)).astype(jnp.float32)            # (T, W)
    slab = taps[:, :, None] * valid[:, None, :]                     # (T, C, W)
    slab = jnp.broadcast_to(slab[:, None], (T, NB, C, W))
    return slab.reshape(T, NB * C * W)


def _images_per_block(N, C, W):
    """v7x (2 TensorCores): keep a parallel batch grid axis.  v5e/v6e (1 TC):
    fold the whole batch into a single grid step to drop per-step overhead."""
    try:
        kind = jax.devices()[0].device_kind.lower()
    except Exception:
        kind = ""
    dual_tc = ("v7" in kind) or ("tpu7" in kind)
    if dual_tc and N > 1:
        return 1
    if N * C * W + 2 * P <= 1024:   # keep the packed row a handful of vregs wide
        return N
    return 1


def dynamic_conv_block(x, a, params, *, images_per_block=None):
    """Pallas forward of DynamicConvBlock. x: (N, C, H, W) NCHW, a: (8,)."""
    N, C, H, W = x.shape
    Co = params['k1'].shape[0]

    NB = images_per_block if images_per_block is not None else _images_per_block(N, C, W)
    if N % NB != 0:
        NB = 1
    G = N // NB
    CPW = NB * C * W
    Hp, Lp = H + 2 * P, CPW + 2 * P

    a = a.astype(jnp.float32)
    offsets, taps = _merged_taps(a, params)
    T = taps.shape[0]

    # Static grouping of taps by their sublane (dy) offset: 11 groups, 65 taps.
    groups = {}
    for t, (dy, dx) in enumerate(offsets):
        groups.setdefault(dy, []).append((t, dx))
    dy_groups = tuple((dy, tuple(tl)) for dy, tl in sorted(groups.items()))

    wt = _tap_weight_slab(offsets, taps, W, NB, C)                   # (T, CPW) VMEM
    w1 = params['k1'][:, :, 0, 0].astype(jnp.float32).reshape(-1)    # (Co*C,)  SMEM

    # Lane-pack + zero-pad in the wrapper (tiny XLA transpose/pad, ~40 KB):
    # lane index = P + (n_local*C + c)*W + w, sublane index = P + h.
    xr = x.astype(jnp.float32).reshape(G, NB, C, H, W)
    xr = jnp.transpose(xr, (0, 3, 1, 2, 4)).reshape(G, H, CPW)
    xpad = jnp.pad(xr, ((0, 0), (P, P), (P, P)))                     # (G, Hp, Lp)

    kernel = functools.partial(_dcb_kernel, dy_groups=dy_groups,
                               H=H, W=W, C=C, Co=Co, NB=NB)

    out_packed = pl.pallas_call(
        kernel,
        out_shape=jax.ShapeDtypeStruct((G, H, NB * Co * W), jnp.float32),
        grid=(G,),
        in_specs=[
            pl.BlockSpec(memory_space=pltpu.MemorySpace.SMEM),       # w1 (Co*C,)
            pl.BlockSpec((T, CPW), lambda g: (0, 0)),                # tap weight slab
            pl.BlockSpec((1, Hp, Lp), lambda g: (g, 0, 0)),          # padded input
        ],
        out_specs=pl.BlockSpec((1, H, NB * Co * W), lambda g: (g, 0, 0)),
        compiler_params=pltpu.CompilerParams(
            dimension_semantics=("parallel",),
            vmem_limit_bytes=32 * 1024 * 1024),
    )(w1, wt, xpad)

    # Unpack (G, H, NB*Co*W) -> (N, Co, H, W).
    out = out_packed.reshape(G, H, NB, Co, W)
    return jnp.transpose(out, (0, 2, 3, 1, 4)).reshape(N, Co, H, W)


def ref_forward(x, a, params):
    """Pure-JAX reference matching the PyTorch forward (NCHW)."""
    C = x.shape[1]

    def dwconv(w, d):
        k = w.shape[-1]
        pad = d * (k - 1) // 2
        return lax.conv_general_dilated(
            x, w, window_strides=(1, 1),
            padding=((pad, pad), (pad, pad)),
            rhs_dilation=(d, d),
            dimension_numbers=('NCHW', 'OIHW', 'NCHW'),
            feature_group_count=C)

    c1 = dwconv(params['k1d1'], 1)
    c2 = dwconv(params['k3d1'], 1)
    c3 = dwconv(params['k5d1'], 1)
    c4 = dwconv(params['k7d1'], 1)
    c5 = c2
    c6 = dwconv(params['k3d5'], 5)
    c7 = dwconv(params['k3d7'], 7)
    out = jax.nn.relu(x * a[0] + c1 * a[1] + c2 * a[2] + c3 * a[3]
                      + c4 * a[4] + c5 * a[5] + c6 * a[6] + c7 * a[7])
    return lax.conv_general_dilated(
        out, params['k1'], (1, 1), 'VALID',
        dimension_numbers=('NCHW', 'OIHW', 'NCHW'))


def init_params(key, channels):
    ks = jax.random.split(key, 8)
    C, Co = channels, channels // 3
    return {
        'k1d1': 0.1 * jax.random.normal(ks[0], (C, 1, 1, 1), jnp.float32),
        'k3d1': 0.1 * jax.random.normal(ks[1], (C, 1, 3, 3), jnp.float32),
        'k5d1': 0.1 * jax.random.normal(ks[2], (C, 1, 5, 5), jnp.float32),
        'k7d1': 0.1 * jax.random.normal(ks[3], (C, 1, 7, 7), jnp.float32),
        # convk3d3 exists in __init__ but is never used in forward(); kept for parity.
        'k3d3': 0.1 * jax.random.normal(ks[4], (C, 1, 3, 3), jnp.float32),
        'k3d5': 0.1 * jax.random.normal(ks[5], (C, 1, 3, 3), jnp.float32),
        'k3d7': 0.1 * jax.random.normal(ks[6], (C, 1, 3, 3), jnp.float32),
        'k1':   0.1 * jax.random.normal(ks[7], (Co, C, 1, 1), jnp.float32),
    }


if __name__ == "__main__":
    key = jax.random.PRNGKey(0)
    k_x, k_a, k_p = jax.random.split(key, 3)

    N, C, H, W = 2, 6, 16, 16
    x = jax.random.normal(k_x, (N, C, H, W), jnp.float32)
    a = jax.random.normal(k_a, (8,), jnp.float32)
    params = init_params(k_p, C)

    fwd = jax.jit(dynamic_conv_block)
    out = jax.block_until_ready(fwd(x, a, params))

    ref = jax.block_until_ready(ref_forward(x, a, params))
    assert out.shape == (N, C // 3, H, W), out.shape
    max_err = float(jnp.max(jnp.abs(out - ref)))
    assert jnp.allclose(out, ref, rtol=1e-4, atol=1e-4), max_err

    print("KERNEL_OK")
</pallas_src>

<mosaic_0001>
module attributes {stable_mosaic.version = 11 : i64} {
  func.func @_dcb_kernel(%arg0: i32, %arg1: memref<12xf32, #tpu.memory_space<smem>>, %arg2: memref<65x192xf32, #tpu.memory_space<vmem>>, %arg3: memref<1x30x206xf32, #tpu.memory_space<vmem>>, %arg4: memref<1x16x64xf32, #tpu.memory_space<vmem>>) attributes {dimension_semantics = [#tpu.dimension_semantics<parallel>], iteration_bounds = array<i64: 1>, scalar_prefetch = 0 : i64, scratch_operands = 0 : i64, tpu.core_type = #tpu.core_type<tc>, window_params = [{transform_indices = @transform_0, window_bounds = array<i64: 12>}, {pipeline_mode = #tpu.pipeline_mode<synchronous>, transform_indices = @transform_1, window_bounds = array<i64: 65, 192>}, {transform_indices = @transform_2, window_bounds = array<i64: 1, 30, 206>}, {transform_indices = @transform_3, window_bounds = array<i64: 1, 16, 64>}]} {
    %cst = arith.constant 0.000000e+00 : f32
    %0 = vector.broadcast %cst : f32 to vector<16x192xf32>
    %cst_0 = arith.constant 0.000000e+00 : f32
    %1 = vector.broadcast %cst_0 : f32 to vector<16x192xf32>
    %cst_1 = arith.constant 0.000000e+00 : f32
    %2 = vector.broadcast %cst_1 : f32 to vector<16x192xf32>
    %cst_2 = arith.constant 0.000000e+00 : f32
    %3 = vector.broadcast %cst_2 : f32 to vector<16x192xf32>
    %c0 = arith.constant 0 : index
    %c0_3 = arith.constant 0 : index
    %c0_4 = arith.constant 0 : index
    %4 = vector.load %arg3[%c0, %c0_3, %c0_4] : memref<1x30x206xf32, #tpu.memory_space<vmem>>, vector<1x16x206xf32>
    %5 = vector.shape_cast %4 : vector<1x16x206xf32> to vector<16x206xf32>
    %c0_5 = arith.constant 0 : index
    %c0_6 = arith.constant 0 : index
    %6 = vector.load %arg2[%c0_5, %c0_6] : memref<65x192xf32, #tpu.memory_space<vmem>>, vector<1x192xf32>
    %7 = vector.extract_strided_slice %5 {offsets = [0, 0], sizes = [16, 192], strides = [1, 1]} : vector<16x206xf32> to vector<16x192xf32>
    %8 = vector.broadcast %6 : vector<1x192xf32> to vector<16x192xf32>
    %9 = arith.mulf %8, %7 : vector<16x192xf32>
    %10 = arith.addf %0, %9 : vector<16x192xf32>
    %c1 = arith.constant 1 : index
    %c0_7 = arith.constant 0 : index
    %11 = vector.load %arg2[%c1, %c0_7] : memref<65x192xf32, #tpu.memory_space<vmem>>, vector<1x192xf32>
    %12 = vector.extract_strided_slice %5 {offsets = [0, 7], sizes = [16, 192], strides = [1, 1]} : vector<16x206xf32> to vector<16x192xf32>
    %13 = vector.broadcast %11 : vector<1x192xf32> to vector<16x192xf32>
    %14 = arith.mulf %13, %12 : vector<16x192xf32>
    %15 = arith.addf %1, %14 : vector<16x192xf32>
    %c2 = arith.constant 2 : index
    %c0_8 = arith.constant 0 : index
    %16 = vector.load %arg2[%c2, %c0_8] : memref<65x192xf32, #tpu.memory_space<vmem>>, vector<1x192xf32>
    %17 = vector.extract_strided_slice %5 {offsets = [0, 14], sizes = [16, 192], strides = [1, 1]} : vector<16x206xf32> to vector<16x192xf32>
    %18 = vector.broadcast %16 : vector<1x192xf32> to vector<16x192xf32>
    %19 = arith.mulf %18, %17 : vector<16x192xf32>
    %20 = arith.addf %2, %19 : vector<16x192xf32>
    %c0_9 = arith.constant 0 : index
    %c2_10 = arith.constant 2 : index
    %c0_11 = arith.constant 0 : index
    %21 = vector.load %arg3[%c0_9, %c2_10, %c0_11] : memref<1x30x206xf32, #tpu.memory_space<vmem>>, vector<1x16x206xf32>
    %22 = vector.shape_cast %21 : vector<1x16x206xf32> to vector<16x206xf32>
    %c3 = arith.constant 3 : index
    %c0_12 = arith.constant 0 : index
    %23 = vector.load %arg2[%c3, %c0_12] : memref<65x192xf32, #tpu.memory_space<vmem>>, vector<1x192xf32>
    %24 = vector.extract_strided_slice %22 {offsets = [0, 2], sizes = [16, 192], strides = [1, 1]} : vector<16x206xf32> to vector<16x192xf32>
    %25 = vector.broadcast %23 : vector<1x192xf32> to vector<16x192xf32>
    %26 = arith.mulf %25, %24 : vector<16x192xf32>
    %27 = arith.addf %3, %26 : vector<16x192xf32>
    %c4 = arith.constant 4 : index
    %c0_13 = arith.constant 0 : index
    %28 = vector.load %arg2[%c4, %c0_13] : memref<65x192xf32, #tpu.memory_space<vmem>>, vector<1x192xf32>
    %29 = vector.extract_strided_slice %22 {offsets = [0, 7], sizes = [16, 192], strides = [1, 1]} : vector<16x206xf32> to vector<16x192xf32>
    %30 = vector.broadcast %28 : vector<1x192xf32> to vector<16x192xf32>
    %31 = arith.mulf %30, %29 : vector<16x192xf32>
    %32 = arith.addf %10, %31 : vector<16x192xf32>
    %c5 = arith.constant 5 : index
    %c0_14 = arith.constant 0 : index
    %33 = vector.load %arg2[%c5, %c0_14] : memref<65x192xf32, #tpu.memory_space<vmem>>, vector<1x192xf32>
    %34 = vector.extract_strided_slice %22 {offsets = [0, 12], sizes = [16, 192], strides = [1, 1]} : vector<16x206xf32> to vector<16x192xf32>
    %35 = vector.broadcast %33 : vector<1x192xf32> to vector<16x192xf32>
    %36 = arith.mulf %35, %34 : vector<16x192xf32>
    %37 = arith.addf %15, %36 : vector<16x192xf32>
    %c0_15 = arith.constant 0 : index
    %c4_16 = arith.constant 4 : index
    %c0_17 = arith.constant 0 : index
    %38 = vector.load %arg3[%c0_15, %c4_16, %c0_17] : memref<1x30x206xf32, #tpu.memory_space<vmem>>, vector<1x16x206xf32>
    %39 = vector.shape_cast %38 : vector<1x16x206xf32> to vector<16x206xf32>
    %c6 = arith.constant 6 : index
    %c0_18 = arith.constant 0 : index
    %40 = vector.load %arg2[%c6, %c0_18] : memref<65x192xf32, #tpu.memory_space<vmem>>, vector<1x192xf32>
    %41 = vector.extract_strided_slice %39 {offsets = [0, 4], sizes = [16, 192], strides = [1, 1]} : vector<16x206xf32> to vector<16x192xf32>
    %42 = vector.broadcast %40 : vector<1x192xf32> to vector<16x192xf32>
    %43 = arith.mulf %42, %41 : vector<16x192xf32>
    %44 = arith.addf %20, %43 : vector<16x192xf32>
    %c7 = arith.constant 7 : index
    %c0_19 = arith.constant 0 : index
    %45 = vector.load %arg2[%c7, %c0_19] : memref<65x192xf32, #tpu.memory_space<vmem>>, vector<1x192xf32>
    %46 = vector.extract_strided_slice %39 {offsets = [0, 5], sizes = [16, 192], strides = [1, 1]} : vector<16x206xf32> to vector<16x192xf32>
    %47 = vector.broadcast %45 : vector<1x192xf32> to vector<16x192xf32>
    %48 = arith.mulf %47, %46 : vector<16x192xf32>
    %49 = arith.addf %27, %48 : vector<16x192xf32>
    %c8 = arith.constant 8 : index
    %c0_20 = arith.constant 0 : index
    %50 = vector.load %arg2[%c8, %c0_20] : memref<65x192xf32, #tpu.memory_space<vmem>>, vector<1x192xf32>
    %51 = vector.extract_strided_slice %39 {offsets = [0, 6], sizes = [16, 192], strides = [1, 1]} : vector<16x206xf32> to vector<16x192xf32>
    %52 = vector.broadcast %50 : vector<1x192xf32> to vector<16x192xf32>
    %53 = arith.mulf %52, %51 : vector<16x192xf32>
    %54 = arith.addf %32, %53 : vector<16x192xf32>
    %c9 = arith.constant 9 : index
    %c0_21 = arith.constant 0 : index
    %55 = vector.load %arg2[%c9, %c0_21] : memref<65x192xf32, #tpu.memory_space<vmem>>, vector<1x192xf32>
    %56 = vector.extract_strided_slice %39 {offsets = [0, 7], sizes = [16, 192], strides = [1, 1]} : vector<16x206xf32> to vector<16x192xf32>
    %57 = vector.broadcast %55 : vector<1x192xf32> to vector<16x192xf32>
    %58 = arith.mulf %57, %56 : vector<16x192xf32>
    %59 = arith.addf %37, %58 : vector<16x192xf32>
    %c10 = arith.constant 10 : index
    %c0_22 = arith.constant 0 : index
    %60 = vector.load %arg2[%c10, %c0_22] : memref<65x192xf32, #tpu.memory_space<vmem>>, vector<1x192xf32>
    %61 = vector.extract_strided_slice %39 {offsets = [0, 8], sizes = [16, 192], strides = [1, 1]} : vector<16x206xf32> to vector<16x192xf32>
    %62 = vector.broadcast %60 : vector<1x192xf32> to vector<16x192xf32>
    %63 = arith.mulf %62, %61 : vector<16x192xf32>
    %64 = arith.addf %44, %63 : vector<16x192xf32>
    %c11 = arith.constant 11 : index
    %c0_23 = arith.constant 0 : index
    %65 = vector.load %arg2[%c11, %c0_23] : memref<65x192xf32, #tpu.memory_space<vmem>>, vector<1x192xf32>
    %66 = vector.extract_strided_slice %39 {offsets = [0, 9], sizes = [16, 192], strides = [1, 1]} : vector<16x206xf32> to vector<16x192xf32>
    %67 = vector.broadcast %65 : vector<1x192xf32> to vector<16x192xf32>
    %68 = arith.mulf %67, %66 : vector<16x192xf32>
    %69 = arith.addf %49, %68 : vector<16x192xf32>
    %c12 = arith.constant 12 : index
    %c0_24 = arith.constant 0 : index
    %70 = vector.load %arg2[%c12, %c0_24] : memref<65x192xf32, #tpu.memory_space<vmem>>, vector<1x192xf32>
    %71 = vector.extract_strided_slice %39 {offsets = [0, 10], sizes = [16, 192], strides = [1, 1]} : vector<16x206xf32> to vector<16x192xf32>
    %72 = vector.broadcast %70 : vector<1x192xf32> to vector<16x192xf32>
    %73 = arith.mulf %72, %71 : vector<16x192xf32>
    %74 = arith.addf %54, %73 : vector<16x192xf32>
    %c0_25 = arith.constant 0 : index
    %c5_26 = arith.constant 5 : index
    %c0_27 = arith.constant 0 : index
    %75 = vector.load %arg3[%c0_25, %c5_26, %c0_27] : memref<1x30x206xf32, #tpu.memory_space<vmem>>, vector<1x16x206xf32>
    %76 = vector.shape_cast %75 : vector<1x16x206xf32> to vector<16x206xf32>
    %c13 = arith.constant 13 : index
    %c0_28 = arith.constant 0 : index
    %77 = vector.load %arg2[%c13, %c0_28] : memref<65x192xf32, #tpu.memory_space<vmem>>, vector<1x192xf32>
    %78 = vector.extract_strided_slice %76 {offsets = [0, 4], sizes = [16, 192], strides = [1, 1]} : vector<16x206xf32> to vector<16x192xf32>
    %79 = vector.broadcast %77 : vector<1x192xf32> to vector<16x192xf32>
    %80 = arith.mulf %79, %78 : vector<16x192xf32>
    %81 = arith.addf %59, %80 : vector<16x192xf32>
    %c14 = arith.constant 14 : index
    %c0_29 = arith.constant 0 : index
    %82 = vector.load %arg2[%c14, %c0_29] : memref<65x192xf32, #tpu.memory_space<vmem>>, vector<1x192xf32>
    %83 = vector.extract_strided_slice %76 {offsets = [0, 5], sizes = [16, 192], strides = [1, 1]} : vector<16x206xf32> to vector<16x192xf32>
    %84 = vector.broadcast %82 : vector<1x192xf32> to vector<16x192xf32>
    %85 = arith.mulf %84, %83 : vector<16x192xf32>
    %86 = arith.addf %64, %85 : vector<16x192xf32>
    %c15 = arith.constant 15 : index
    %c0_30 = arith.constant 0 : index
    %87 = vector.load %arg2[%c15, %c0_30] : memref<65x192xf32, #tpu.memory_space<vmem>>, vector<1x192xf32>
    %88 = vector.extract_strided_slice %76 {offsets = [0, 6], sizes = [16, 192], strides = [1, 1]} : vector<16x206xf32> to vector<16x192xf32>
    %89 = vector.broadcast %87 : vector<1x192xf32> to vector<16x192xf32>
    %90 = arith.mulf %89, %88 : vector<16x192xf32>
    %91 = arith.addf %69, %90 : vector<16x192xf32>
    %c16 = arith.constant 16 : index
    %c0_31 = arith.constant 0 : index
    %92 = vector.load %arg2[%c16, %c0_31] : memref<65x192xf32, #tpu.memory_space<vmem>>, vector<1x192xf32>
    %93 = vector.extract_strided_slice %76 {offsets = [0, 7], sizes = [16, 192], strides = [1, 1]} : vector<16x206xf32> to vector<16x192xf32>
    %94 = vector.broadcast %92 : vector<1x192xf32> to vector<16x192xf32>
    %95 = arith.mulf %94, %93 : vector<16x192xf32>
    %96 = arith.addf %74, %95 : vector<16x192xf32>
    %c17 = arith.constant 17 : index
    %c0_32 = arith.constant 0 : index
    %97 = vector.load %arg2[%c17, %c0_32] : memref<65x192xf32, #tpu.memory_space<vmem>>, vector<1x192xf32>
    %98 = vector.extract_strided_slice %76 {offsets = [0, 8], sizes = [16, 192], strides = [1, 1]} : vector<16x206xf32> to vector<16x192xf32>
    %99 = vector.broadcast %97 : vector<1x192xf32> to vector<16x192xf32>
    %100 = arith.mulf %99, %98 : vector<16x192xf32>
    %101 = arith.addf %81, %100 : vector<16x192xf32>
    %c18 = arith.constant 18 : index
    %c0_33 = arith.constant 0 : index
    %102 = vector.load %arg2[%c18, %c0_33] : memref<65x192xf32, #tpu.memory_space<vmem>>, vector<1x192xf32>
    %103 = vector.extract_strided_slice %76 {offsets = [0, 9], sizes = [16, 192], strides = [1, 1]} : vector<16x206xf32> to vector<16x192xf32>
    %104 = vector.broadcast %102 : vector<1x192xf32> to vector<16x192xf32>
    %105 = arith.mulf %104, %103 : vector<16x192xf32>
    %106 = arith.addf %86, %105 : vector<16x192xf32>
    %c19 = arith.constant 19 : index
    %c0_34 = arith.constant 0 : index
    %107 = vector.load %arg2[%c19, %c0_34] : memref<65x192xf32, #tpu.memory_space<vmem>>, vector<1x192xf32>
    %108 = vector.extract_strided_slice %76 {offsets = [0, 10], sizes = [16, 192], strides = [1, 1]} : vector<16x206xf32> to vector<16x192xf32>
    %109 = vector.broadcast %107 : vector<1x192xf32> to vector<16x192xf32>
    %110 = arith.mulf %109, %108 : vector<16x192xf32>
    %111 = arith.addf %91, %110 : vector<16x192xf32>
    %c0_35 = arith.constant 0 : index
    %c6_36 = arith.constant 6 : index
    %c0_37 = arith.constant 0 : index
    %112 = vector.load %arg3[%c0_35, %c6_36, %c0_37] : memref<1x30x206xf32, #tpu.memory_space<vmem>>, vector<1x16x206xf32>
    %113 = vector.shape_cast %112 : vector<1x16x206xf32> to vector<16x206xf32>
    %c20 = arith.constant 20 : index
    %c0_38 = arith.constant 0 : index
    %114 = vector.load %arg2[%c20, %c0_38] : memref<65x192xf32, #tpu.memory_space<vmem>>, vector<1x192xf32>
    %115 = vector.extract_strided_slice %113 {offsets = [0, 4], sizes = [16, 192], strides = [1, 1]} : vector<16x206xf32> to vector<16x192xf32>
    %116 = vector.broadcast %114 : vector<1x192xf32> to vector<16x192xf32>
    %117 = arith.mulf %116, %115 : vector<16x192xf32>
    %118 = arith.addf %96, %117 : vector<16x192xf32>
    %c21 = arith.constant 21 : index
    %c0_39 = arith.constant 0 : index
    %119 = vector.load %arg2[%c21, %c0_39] : memref<65x192xf32, #tpu.memory_space<vmem>>, vector<1x192xf32>
    %120 = vector.extract_strided_slice %113 {offsets = [0, 5], sizes = [16, 192], strides = [1, 1]} : vector<16x206xf32> to vector<16x192xf32>
    %121 = vector.broadcast %119 : vector<1x192xf32> to vector<16x192xf32>
    %122 = arith.mulf %121, %120 : vector<16x192xf32>
    %123 = arith.addf %101, %122 : vector<16x192xf32>
    %c22 = arith.constant 22 : index
    %c0_40 = arith.constant 0 : index
    %124 = vector.load %arg2[%c22, %c0_40] : memref<65x192xf32, #tpu.memory_space<vmem>>, vector<1x192xf32>
    %125 = vector.extract_strided_slice %113 {offsets = [0, 6], sizes = [16, 192], strides = [1, 1]} : vector<16x206xf32> to vector<16x192xf32>
    %126 = vector.broadcast %124 : vector<1x192xf32> to vector<16x192xf32>
    %127 = arith.mulf %126, %125 : vector<16x192xf32>
    %128 = arith.addf %106, %127 : vector<16x192xf32>
    %c23 = arith.constant 23 : index
    %c0_41 = arith.constant 0 : index
    %129 = vector.load %arg2[%c23, %c0_41] : memref<65x192xf32, #tpu.memory_space<vmem>>, vector<1x192xf32>
    %130 = vector.extract_strided_slice %113 {offsets = [0, 7], sizes = [16, 192], strides = [1, 1]} : vector<16x206xf32> to vector<16x192xf32>
    %131 = vector.broadcast %129 : vector<1x192xf32> to vector<16x192xf32>
    %132 = arith.mulf %131, %130 : vector<16x192xf32>
    %133 = arith.addf %111, %132 : vector<16x192xf32>
    %c24 = arith.constant 24 : index
    %c0_42 = arith.constant 0 : index
    %134 = vector.load %arg2[%c24, %c0_42] : memref<65x192xf32, #tpu.memory_space<vmem>>, vector<1x192xf32>
    %135 = vector.extract_strided_slice %113 {offsets = [0, 8], sizes = [16, 192], strides = [1, 1]} : vector<16x206xf32> to vector<16x192xf32>
    %136 = vector.broadcast %134 : vector<1x192xf32> to vector<16x192xf32>
    %137 = arith.mulf %136, %135 : vector<16x192xf32>
    %138 = arith.addf %118, %137 : vector<16x192xf32>
    %c25 = arith.constant 25 : index
    %c0_43 = arith.constant 0 : index
    %139 = vector.load %arg2[%c25, %c0_43] : memref<65x192xf32, #tpu.memory_space<vmem>>, vector<1x192xf32>
    %140 = vector.extract_strided_slice %113 {offsets = [0, 9], sizes = [16, 192], strides = [1, 1]} : vector<16x206xf32> to vector<16x192xf32>
    %141 = vector.broadcast %139 : vector<1x192xf32> to vector<16x192xf32>
    %142 = arith.mulf %141, %140 : vector<16x192xf32>
    %143 = arith.addf %123, %142 : vector<16x192xf32>
    %c26 = arith.constant 26 : index
    %c0_44 = arith.constant 0 : index
    %144 = vector.load %arg2[%c26, %c0_44] : memref<65x192xf32, #tpu.memory_space<vmem>>, vector<1x192xf32>
    %145 = vector.extract_strided_slice %113 {offsets = [0, 10], sizes = [16, 192], strides = [1, 1]} : vector<16x206xf32> to vector<16x192xf32>
    %146 = vector.broadcast %144 : vector<1x192xf32> to vector<16x192xf32>
    %147 = arith.mulf %146, %145 : vector<16x192xf32>
    %148 = arith.addf %128, %147 : vector<16x192xf32>
    %c0_45 = arith.constant 0 : index
    %c7_46 = arith.constant 7 : index
    %c0_47 = arith.constant 0 : index
    %149 = vector.load %arg3[%c0_45, %c7_46, %c0_47] : memref<1x30x206xf32, #tpu.memory_space<vmem>>, vector<1x16x206xf32>
    %150 = vector.shape_cast %149 : vector<1x16x206xf32> to vector<16x206xf32>
    %c27 = arith.constant 27 : index
    %c0_48 = arith.constant 0 : index
    %151 = vector.load %arg2[%c27, %c0_48] : memref<65x192xf32, #tpu.memory_space<vmem>>, vector<1x192xf32>
    %152 = vector.extract_strided_slice %150 {offsets = [0, 0], sizes = [16, 192], strides = [1, 1]} : vector<16x206xf32> to vector<16x192xf32>
    %153 = vector.broadcast %151 : vector<1x192xf32> to vector<16x192xf32>
    %154 = arith.mulf %153, %152 : vector<16x192xf32>
    %155 = arith.addf %133, %154 : vector<16x192xf32>
    %c28 = arith.constant 28 : index
    %c0_49 = arith.constant 0 : index
    %156 = vector.load %arg2[%c28, %c0_49] : memref<65x192xf32, #tpu.memory_space<vmem>>, vector<1x192xf32>
    %157 = vector.extract_strided_slice %150 {offsets = [0, 2], sizes = [16, 192], strides = [1, 1]} : vector<16x206xf32> to vector<16x192xf32>
    %158 = vector.broadcast %156 : vector<1x192xf32> to vector<16x192xf32>
    %159 = arith.mulf %158, %157 : vector<16x192xf32>
    %160 = arith.addf %138, %159 : vector<16x192xf32>
    %c29 = arith.constant 29 : index
    %c0_50 = arith.constant 0 : index
    %161 = vector.load %arg2[%c29, %c0_50] : memref<65x192xf32, #tpu.memory_space<vmem>>, vector<1x192xf32>
    %162 = vector.extract_strided_slice %150 {offsets = [0, 4], sizes = [16, 192], strides = [1, 1]} : vector<16x206xf32> to vector<16x192xf32>
    %163 = vector.broadcast %161 : vector<1x192xf32> to vector<16x192xf32>
    %164 = arith.mulf %163, %162 : vector<16x192xf32>
    %165 = arith.addf %143, %164 : vector<16x192xf32>
    %c30 = arith.constant 30 : index
    %c0_51 = arith.constant 0 : index
    %166 = vector.load %arg2[%c30, %c0_51] : memref<65x192xf32, #tpu.memory_space<vmem>>, vector<1x192xf32>
    %167 = vector.extract_strided_slice %150 {offsets = [0, 5], sizes = [16, 192], strides = [1, 1]} : vector<16x206xf32> to vector<16x192xf32>
    %168 = vector.broadcast %166 : vector<1x192xf32> to vector<16x192xf32>
    %169 = arith.mulf %168, %167 : vector<16x192xf32>
    %170 = arith.addf %148, %169 : vector<16x192xf32>
    %c31 = arith.constant 31 : index
    %c0_52 = arith.constant 0 : index
    %171 = vector.load %arg2[%c31, %c0_52] : memref<65x192xf32, #tpu.memory_space<vmem>>, vector<1x192xf32>
    %172 = vector.extract_strided_slice %150 {offsets = [0, 6], sizes = [16, 192], strides = [1, 1]} : vector<16x206xf32> to vector<16x192xf32>
    %173 = vector.broadcast %171 : vector<1x192xf32> to vector<16x192xf32>
    %174 = arith.mulf %173, %172 : vector<16x192xf32>
    %175 = arith.addf %155, %174 : vector<16x192xf32>
    %c32 = arith.constant 32 : index
    %c0_53 = arith.constant 0 : index
    %176 = vector.load %arg2[%c32, %c0_53] : memref<65x192xf32, #tpu.memory_space<vmem>>, vector<1x192xf32>
    %177 = vector.extract_strided_slice %150 {offsets = [0, 7], sizes = [16, 192], strides = [1, 1]} : vector<16x206xf32> to vector<16x192xf32>
    %178 = vector.broadcast %176 : vector<1x192xf32> to vector<16x192xf32>
    %179 = arith.mulf %178, %177 : vector<16x192xf32>
    %180 = arith.addf %160, %179 : vector<16x192xf32>
    %c33 = arith.constant 33 : index
    %c0_54 = arith.constant 0 : index
    %181 = vector.load %arg2[%c33, %c0_54] : memref<65x192xf32, #tpu.memory_space<vmem>>, vector<1x192xf32>
    %182 = vector.extract_strided_slice %150 {offsets = [0, 8], sizes = [16, 192], strides = [1, 1]} : vector<16x206xf32> to vector<16x192xf32>
    %183 = vector.broadcast %181 : vector<1x192xf32> to vector<16x192xf32>
    %184 = arith.mulf %183, %182 : vector<16x192xf32>
    %185 = arith.addf %165, %184 : vector<16x192xf32>
    %c34 = arith.constant 34 : index
    %c0_55 = arith.constant 0 : index
    %186 = vector.load %arg2[%c34, %c0_55] : memref<65x192xf32, #tpu.memory_space<vmem>>, vector<1x192xf32>
    %187 = vector.extract_strided_slice %150 {offsets = [0, 9], sizes = [16, 192], strides = [1, 1]} : vector<16x206xf32> to vector<16x192xf32>
    %188 = vector.broadcast %186 : vector<1x192xf32> to vector<16x192xf32>
    %189 = arith.mulf %188, %187 : vector<16x192xf32>
    %190 = arith.addf %170, %189 : vector<16x192xf32>
    %c35 = arith.constant 35 : index
    %c0_56 = arith.constant 0 : index
    %191 = vector.load %arg2[%c35, %c0_56] : memref<65x192xf32, #tpu.memory_space<vmem>>, vector<1x192xf32>
    %192 = vector.extract_strided_slice %150 {offsets = [0, 10], sizes = [16, 192], strides = [1, 1]} : vector<16x206xf32> to vector<16x192xf32>
    %193 = vector.broadcast %191 : vector<1x192xf32> to vector<16x192xf32>
    %194 = arith.mulf %193, %192 : vector<16x192xf32>
    %195 = arith.addf %175, %194 : vector<16x192xf32>
    %c36 = arith.constant 36 : index
    %c0_57 = arith.constant 0 : index
    %196 = vector.load %arg2[%c36, %c0_57] : memref<65x192xf32, #tpu.memory_space<vmem>>, vector<1x192xf32>
    %197 = vector.extract_strided_slice %150 {offsets = [0, 12], sizes = [16, 192], strides = [1, 1]} : vector<16x206xf32> to vector<16x192xf32>
    %198 = vector.broadcast %196 : vector<1x192xf32> to vector<16x192xf32>
    %199 = arith.mulf %198, %197 : vector<16x192xf32>
    %200 = arith.addf %180, %199 : vector<16x192xf32>
    %c37 = arith.constant 37 : index
    %c0_58 = arith.constant 0 : index
    %201 = vector.load %arg2[%c37, %c0_58] : memref<65x192xf32, #tpu.memory_space<vmem>>, vector<1x192xf32>
    %202 = vector.extract_strided_slice %150 {offsets = [0, 14], sizes = [16, 192], strides = [1, 1]} : vector<16x206xf32> to vector<16x192xf32>
    %203 = vector.broadcast %201 : vector<1x192xf32> to vector<16x192xf32>
    %204 = arith.mulf %203, %202 : vector<16x192xf32>
    %205 = arith.addf %185, %204 : vector<16x192xf32>
    %c0_59 = arith.constant 0 : index
    %c8_60 = arith.constant 8 : index
    %c0_61 = arith.constant 0 : index
    %206 = vector.load %arg3[%c0_59, %c8_60, %c0_61] : memref<1x30x206xf32, #tpu.memory_space<vmem>>, vector<1x16x206xf32>
    %207 = vector.shape_cast %206 : vector<1x16x206xf32> to vector<16x206xf32>
    %c38 = arith.constant 38 : index
    %c0_62 = arith.constant 0 : index
    %208 = vector.load %arg2[%c38, %c0_62] : memref<65x192xf32, #tpu.memory_space<vmem>>, vector<1x192xf32>
    %209 = vector.extract_strided_slice %207 {offsets = [0, 4], sizes = [16, 192], strides = [1, 1]} : vector<16x206xf32> to vector<16x192xf32>
    %210 = vector.broadcast %208 : vector<1x192xf32> to vector<16x192xf32>
    %211 = arith.mulf %210, %209 : vector<16x192xf32>
    %212 = arith.addf %190, %211 : vector<16x192xf32>
    %c39 = arith.constant 39 : index
    %c0_63 = arith.constant 0 : index
    %213 = vector.load %arg2[%c39, %c0_63] : memref<65x192xf32, #tpu.memory_space<vmem>>, vector<1x192xf32>
    %214 = vector.extract_strided_slice %207 {offsets = [0, 5], sizes = [16, 192], strides = [1, 1]} : vector<16x206xf32> to vector<16x192xf32>
    %215 = vector.broadcast %213 : vector<1x192xf32> to vector<16x192xf32>
    %216 = arith.mulf %215, %214 : vector<16x192xf32>
    %217 = arith.addf %195, %216 : vector<16x192xf32>
    %c40 = arith.constant 40 : index
    %c0_64 = arith.constant 0 : index
    %218 = vector.load %arg2[%c40, %c0_64] : memref<65x192xf32, #tpu.memory_space<vmem>>, vector<1x192xf32>
    %219 = vector.extract_strided_slice %207 {offsets = [0, 6], sizes = [16, 192], strides = [1, 1]} : vector<16x206xf32> to vector<16x192xf32>
    %220 = vector.broadcast %218 : vector<1x192xf32> to vector<16x192xf32>
    %221 = arith.mulf %220, %219 : vector<16x192xf32>
    %222 = arith.addf %200, %221 : vector<16x192xf32>
    %c41 = arith.constant 41 : index
    %c0_65 = arith.constant 0 : index
    %223 = vector.load %arg2[%c41, %c0_65] : memref<65x192xf32, #tpu.memory_space<vmem>>, vector<1x192xf32>
    %224 = vector.extract_strided_slice %207 {offsets = [0, 7], sizes = [16, 192], strides = [1, 1]} : vector<16x206xf32> to vector<16x192xf32>
    %225 = vector.broadcast %223 : vector<1x192xf32> to vector<16x192xf32>
    %226 = arith.mulf %225, %224 : vector<16x192xf32>
    %227 = arith.addf %205, %226 : vector<16x192xf32>
    %c42 = arith.constant 42 : index
    %c0_66 = arith.constant 0 : index
    %228 = vector.load %arg2[%c42, %c0_66] : memref<65x192xf32, #tpu.memory_space<vmem>>, vector<1x192xf32>
    %229 = vector.extract_strided_slice %207 {offsets = [0, 8], sizes = [16, 192], strides = [1, 1]} : vector<16x206xf32> to vector<16x192xf32>
    %230 = vector.broadcast %228 : vector<1x192xf32> to vector<16x192xf32>
    %231 = arith.mulf %230, %229 : vector<16x192xf32>
    %232 = arith.addf %212, %231 : vector<16x192xf32>
    %c43 = arith.constant 43 : index
    %c0_67 = arith.constant 0 : index
    %233 = vector.load %arg2[%c43, %c0_67] : memref<65x192xf32, #tpu.memory_space<vmem>>, vector<1x192xf32>
    %234 = vector.extract_strided_slice %207 {offsets = [0, 9], sizes = [16, 192], strides = [1, 1]} : vector<16x206xf32> to vector<16x192xf32>
    %235 = vector.broadcast %233 : vector<1x192xf32> to vector<16x192xf32>
    %236 = arith.mulf %235, %234 : vector<16x192xf32>
    %237 = arith.addf %217, %236 : vector<16x192xf32>
    %c44 = arith.constant 44 : index
    %c0_68 = arith.constant 0 : index
    %238 = vector.load %arg2[%c44, %c0_68] : memref<65x192xf32, #tpu.memory_space<vmem>>, vector<1x192xf32>
    %239 = vector.extract_strided_slice %207 {offsets = [0, 10], sizes = [16, 192], strides = [1, 1]} : vector<16x206xf32> to vector<16x192xf32>
    %240 = vector.broadcast %238 : vector<1x192xf32> to vector<16x192xf32>
    %241 = arith.mulf %240, %239 : vector<16x192xf32>
    %242 = arith.addf %222, %241 : vector<16x192xf32>
    %c0_69 = arith.constant 0 : index
    %c9_70 = arith.constant 9 : index
    %c0_71 = arith.constant 0 : index
    %243 = vector.load %arg3[%c0_69, %c9_70, %c0_71] : memref<1x30x206xf32, #tpu.memory_space<vmem>>, vector<1x16x206xf32>
    %244 = vector.shape_cast %243 : vector<1x16x206xf32> to vector<16x206xf32>
    %c45 = arith.constant 45 : index
    %c0_72 = arith.constant 0 : index
    %245 = vector.load %arg2[%c45, %c0_72] : memref<65x192xf32, #tpu.memory_space<vmem>>, vector<1x192xf32>
    %246 = vector.extract_strided_slice %244 {offsets = [0, 4], sizes = [16, 192], strides = [1, 1]} : vector<16x206xf32> to vector<16x192xf32>
    %247 = vector.broadcast %245 : vector<1x192xf32> to vector<16x192xf32>
    %248 = arith.mulf %247, %246 : vector<16x192xf32>
    %249 = arith.addf %227, %248 : vector<16x192xf32>
    %c46 = arith.constant 46 : index
    %c0_73 = arith.constant 0 : index
    %250 = vector.load %arg2[%c46, %c0_73] : memref<65x192xf32, #tpu.memory_space<vmem>>, vector<1x192xf32>
    %251 = vector.extract_strided_slice %244 {offsets = [0, 5], sizes = [16, 192], strides = [1, 1]} : vector<16x206xf32> to vector<16x192xf32>
    %252 = vector.broadcast %250 : vector<1x192xf32> to vector<16x192xf32>
    %253 = arith.mulf %252, %251 : vector<16x192xf32>
    %254 = arith.addf %232, %253 : vector<16x192xf32>
    %c47 = arith.constant 47 : index
    %c0_74 = arith.constant 0 : index
    %255 = vector.load %arg2[%c47, %c0_74] : memref<65x192xf32, #tpu.memory_space<vmem>>, vector<1x192xf32>
    %256 = vector.extract_strided_slice %244 {offsets = [0, 6], sizes = [16, 192], strides = [1, 1]} : vector<16x206xf32> to vector<16x192xf32>
    %257 = vector.broadcast %255 : vector<1x192xf32> to vector<16x192xf32>
    %258 = arith.mulf %257, %256 : vector<16x192xf32>
    %259 = arith.addf %237, %258 : vector<16x192xf32>
    %c48 = arith.constant 48 : index
    %c0_75 = arith.constant 0 : index
    %260 = vector.load %arg2[%c48, %c0_75] : memref<65x192xf32, #tpu.memory_space<vmem>>, vector<1x192xf32>
    %261 = vector.extract_strided_slice %244 {offsets = [0, 7], sizes = [16, 192], strides = [1, 1]} : vector<16x206xf32> to vector<16x192xf32>
    %262 = vector.broadcast %260 : vector<1x192xf32> to vector<16x192xf32>
    %263 = arith.mulf %262, %261 : vector<16x192xf32>
    %264 = arith.addf %242, %263 : vector<16x192xf32>
    %c49 = arith.constant 49 : index
    %c0_76 = arith.constant 0 : index
    %265 = vector.load %arg2[%c49, %c0_76] : memref<65x192xf32, #tpu.memory_space<vmem>>, vector<1x192xf32>
    %266 = vector.extract_strided_slice %244 {offsets = [0, 8], sizes = [16, 192], strides = [1, 1]} : vector<16x206xf32> to vector<16x192xf32>
    %267 = vector.broadcast %265 : vector<1x192xf32> to vector<16x192xf32>
    %268 = arith.mulf %267, %266 : vector<16x192xf32>
    %269 = arith.addf %249, %268 : vector<16x192xf32>
    %c50 = arith.constant 50 : index
    %c0_77 = arith.constant 0 : index
    %270 = vector.load %arg2[%c50, %c0_77] : memref<65x192xf32, #tpu.memory_space<vmem>>, vector<1x192xf32>
    %271 = vector.extract_strided_slice %244 {offsets = [0, 9], sizes = [16, 192], strides = [1, 1]} : vector<16x206xf32> to vector<16x192xf32>
    %272 = vector.broadcast %270 : vector<1x192xf32> to vector<16x192xf32>
    %273 = arith.mulf %272, %271 : vector<16x192xf32>
    %274 = arith.addf %254, %273 : vector<16x192xf32>
    %c51 = arith.constant 51 : index
    %c0_78 = arith.constant 0 : index
    %275 = vector.load %arg2[%c51, %c0_78] : memref<65x192xf32, #tpu.memory_space<vmem>>, vector<1x192xf32>
    %276 = vector.extract_strided_slice %244 {offsets = [0, 10], sizes = [16, 192], strides = [1, 1]} : vector<16x206xf32> to vector<16x192xf32>
    %277 = vector.broadcast %275 : vector<1x192xf32> to vector<16x192xf32>
    %278 = arith.mulf %277, %276 : vector<16x192xf32>
    %279 = arith.addf %259, %278 : vector<16x192xf32>
    %c0_79 = arith.constant 0 : index
    %c10_80 = arith.constant 10 : index
    %c0_81 = arith.constant 0 : index
    %280 = vector.load %arg3[%c0_79, %c10_80, %c0_81] : memref<1x30x206xf32, #tpu.memory_space<vmem>>, vector<1x16x206xf32>
    %281 = vector.shape_cast %280 : vector<1x16x206xf32> to vector<16x206xf32>
    %c52 = arith.constant 52 : index
    %c0_82 = arith.constant 0 : index
    %282 = vector.load %arg2[%c52, %c0_82] : memref<65x192xf32, #tpu.memory_space<vmem>>, vector<1x192xf32>
    %283 = vector.extract_strided_slice %281 {offsets = [0, 4], sizes = [16, 192], strides = [1, 1]} : vector<16x206xf32> to vector<16x192xf32>
    %284 = vector.broadcast %282 : vector<1x192xf32> to vector<16x192xf32>
    %285 = arith.mulf %284, %283 : vector<16x192xf32>
    %286 = arith.addf %264, %285 : vector<16x192xf32>
    %c53 = arith.constant 53 : index
    %c0_83 = arith.constant 0 : index
    %287 = vector.load %arg2[%c53, %c0_83] : memref<65x192xf32, #tpu.memory_space<vmem>>, vector<1x192xf32>
    %288 = vector.extract_strided_slice %281 {offsets = [0, 5], sizes = [16, 192], strides = [1, 1]} : vector<16x206xf32> to vector<16x192xf32>
    %289 = vector.broadcast %287 : vector<1x192xf32> to vector<16x192xf32>
    %290 = arith.mulf %289, %288 : vector<16x192xf32>
    %291 = arith.addf %269, %290 : vector<16x192xf32>
    %c54 = arith.constant 54 : index
    %c0_84 = arith.constant 0 : index
    %292 = vector.load %arg2[%c54, %c0_84] : memref<65x192xf32, #tpu.memory_space<vmem>>, vector<1x192xf32>
    %293 = vector.extract_strided_slice %281 {offsets = [0, 6], sizes = [16, 192], strides = [1, 1]} : vector<16x206xf32> to vector<16x192xf32>
    %294 = vector.broadcast %292 : vector<1x192xf32> to vector<16x192xf32>
    %295 = arith.mulf %294, %293 : vector<16x192xf32>
    %296 = arith.addf %274, %295 : vector<16x192xf32>
    %c55 = arith.constant 55 : index
    %c0_85 = arith.constant 0 : index
    %297 = vector.load %arg2[%c55, %c0_85] : memref<65x192xf32, #tpu.memory_space<vmem>>, vector<1x192xf32>
    %298 = vector.extract_strided_slice %281 {offsets = [0, 7], sizes = [16, 192], strides = [1, 1]} : vector<16x206xf32> to vector<16x192xf32>
    %299 = vector.broadcast %297 : vector<1x192xf32> to vector<16x192xf32>
    %300 = arith.mulf %299, %298 : vector<16x192xf32>
    %301 = arith.addf %279, %300 : vector<16x192xf32>
    %c56 = arith.constant 56 : index
    %c0_86 = arith.constant 0 : index
    %302 = vector.load %arg2[%c56, %c0_86] : memref<65x192xf32, #tpu.memory_space<vmem>>, vector<1x192xf32>
    %303 = vector.extract_strided_slice %281 {offsets = [0, 8], sizes = [16, 192], strides = [1, 1]} : vector<16x206xf32> to vector<16x192xf32>
    %304 = vector.broadcast %302 : vector<1x192xf32> to vector<16x192xf32>
    %305 = arith.mulf %304, %303 : vector<16x192xf32>
    %306 = arith.addf %286, %305 : vector<16x192xf32>
    %c57 = arith.constant 57 : index
    %c0_87 = arith.constant 0 : index
    %307 = vector.load %arg2[%c57, %c0_87] : memref<65x192xf32, #tpu.memory_space<vmem>>, vector<1x192xf32>
    %308 = vector.extract_strided_slice %281 {offsets = [0, 9], sizes = [16, 192], strides = [1, 1]} : vector<16x206xf32> to vector<16x192xf32>
    %309 = vector.broadcast %307 : vector<1x192xf32> to vector<16x192xf32>
    %310 = arith.mulf %309, %308 : vector<16x192xf32>
    %311 = arith.addf %291, %310 : vector<16x192xf32>
    %c58 = arith.constant 58 : index
    %c0_88 = arith.constant 0 : index
    %312 = vector.load %arg2[%c58, %c0_88] : memref<65x192xf32, #tpu.memory_space<vmem>>, vector<1x192xf32>
    %313 = vector.extract_strided_slice %281 {offsets = [0, 10], sizes = [16, 192], strides = [1, 1]} : vector<16x206xf32> to vector<16x192xf32>
    %314 = vector.broadcast %312 : vector<1x192xf32> to vector<16x192xf32>
    %315 = arith.mulf %314, %313 : vector<16x192xf32>
    %316 = arith.addf %296, %315 : vector<16x192xf32>
    %c0_89 = arith.constant 0 : index
    %c12_90 = arith.constant 12 : index
    %c0_91 = arith.constant 0 : index
    %317 = vector.load %arg3[%c0_89, %c12_90, %c0_91] : memref<1x30x206xf32, #tpu.memory_space<vmem>>, vector<1x16x206xf32>
    %318 = vector.shape_cast %317 : vector<1x16x206xf32> to vector<16x206xf32>
    %c59 = arith.constant 59 : index
    %c0_92 = arith.constant 0 : index
    %319 = vector.load %arg2[%c59, %c0_92] : memref<65x192xf32, #tpu.memory_space<vmem>>, vector<1x192xf32>
    %320 = vector.extract_strided_slice %318 {offsets = [0, 2], sizes = [16, 192], strides = [1, 1]} : vector<16x206xf32> to vector<16x192xf32>
    %321 = vector.broadcast %319 : vector<1x192xf32> to vector<16x192xf32>
    %322 = arith.mulf %321, %320 : vector<16x192xf32>
    %323 = arith.addf %301, %322 : vector<16x192xf32>
    %c60 = arith.constant 60 : index
    %c0_93 = arith.constant 0 : index
    %324 = vector.load %arg2[%c60, %c0_93] : memref<65x192xf32, #tpu.memory_space<vmem>>, vector<1x192xf32>
    %325 = vector.extract_strided_slice %318 {offsets = [0, 7], sizes = [16, 192], strides = [1, 1]} : vector<16x206xf32> to vector<16x192xf32>
    %326 = vector.broadcast %324 : vector<1x192xf32> to vector<16x192xf32>
    %327 = arith.mulf %326, %325 : vector<16x192xf32>
    %328 = arith.addf %306, %327 : vector<16x192xf32>
    %c61 = arith.constant 61 : index
    %c0_94 = arith.constant 0 : index
    %329 = vector.load %arg2[%c61, %c0_94] : memref<65x192xf32, #tpu.memory_space<vmem>>, vector<1x192xf32>
    %330 = vector.extract_strided_slice %318 {offsets = [0, 12], sizes = [16, 192], strides = [1, 1]} : vector<16x206xf32> to vector<16x192xf32>
    %331 = vector.broadcast %329 : vector<1x192xf32> to vector<16x192xf32>
    %332 = arith.mulf %331, %330 : vector<16x192xf32>
    %333 = arith.addf %311, %332 : vector<16x192xf32>
    %c0_95 = arith.constant 0 : index
    %c14_96 = arith.constant 14 : index
    %c0_97 = arith.constant 0 : index
    %334 = vector.load %arg3[%c0_95, %c14_96, %c0_97] : memref<1x30x206xf32, #tpu.memory_space<vmem>>, vector<1x16x206xf32>
    %335 = vector.shape_cast %334 : vector<1x16x206xf32> to vector<16x206xf32>
    %c62 = arith.constant 62 : index
    %c0_98 = arith.constant 0 : index
    %336 = vector.load %arg2[%c62, %c0_98] : memref<65x192xf32, #tpu.memory_space<vmem>>, vector<1x192xf32>
    %337 = vector.extract_strided_slice %335 {offsets = [0, 0], sizes = [16, 192], strides = [1, 1]} : vector<16x206xf32> to vector<16x192xf32>
    %338 = vector.broadcast %336 : vector<1x192xf32> to vector<16x192xf32>
    %339 = arith.mulf %338, %337 : vector<16x192xf32>
    %340 = arith.addf %316, %339 : vector<16x192xf32>
    %c63 = arith.constant 63 : index
    %c0_99 = arith.constant 0 : index
    %341 = vector.load %arg2[%c63, %c0_99] : memref<65x192xf32, #tpu.memory_space<vmem>>, vector<1x192xf32>
    %342 = vector.extract_strided_slice %335 {offsets = [0, 7], sizes = [16, 192], strides = [1, 1]} : vector<16x206xf32> to vector<16x192xf32>
    %343 = vector.broadcast %341 : vector<1x192xf32> to vector<16x192xf32>
    %344 = arith.mulf %343, %342 : vector<16x192xf32>
    %345 = arith.addf %323, %344 : vector<16x192xf32>
    %c64 = arith.constant 64 : index
    %c0_100 = arith.constant 0 : index
    %346 = vector.load %arg2[%c64, %c0_100] : memref<65x192xf32, #tpu.memory_space<vmem>>, vector<1x192xf32>
    %347 = vector.extract_strided_slice %335 {offsets = [0, 14], sizes = [16, 192], strides = [1, 1]} : vector<16x206xf32> to vector<16x192xf32>
    %348 = vector.broadcast %346 : vector<1x192xf32> to vector<16x192xf32>
    %349 = arith.mulf %348, %347 : vector<16x192xf32>
    %350 = arith.addf %328, %349 : vector<16x192xf32>
    %351 = arith.addf %350, %333 : vector<16x192xf32>
    %352 = arith.addf %340, %345 : vector<16x192xf32>
    %353 = arith.addf %351, %352 : vector<16x192xf32>
    %cst_101 = arith.constant 0.000000e+00 : f32
    %354 = vector.broadcast %cst_101 : f32 to vector<16x192xf32>
    %355 = arith.maximumf %353, %354 : vector<16x192xf32>
    %356 = vector.extract_strided_slice %355 {offsets = [0, 0], sizes = [16, 16], strides = [1, 1]} : vector<16x192xf32> to vector<16x16xf32>
    %357 = vector.extract_strided_slice %355 {offsets = [0, 16], sizes = [16, 16], strides = [1, 1]} : vector<16x192xf32> to vector<16x16xf32>
    %358 = vector.extract_strided_slice %355 {offsets = [0, 32], sizes = [16, 16], strides = [1, 1]} : vector<16x192xf32> to vector<16x16xf32>
    %359 = vector.extract_strided_slice %355 {offsets = [0, 48], sizes = [16, 16], strides = [1, 1]} : vector<16x192xf32> to vector<16x16xf32>
    %360 = vector.extract_strided_slice %355 {offsets = [0, 64], sizes = [16, 16], strides = [1, 1]} : vector<16x192xf32> to vector<16x16xf32>
    %361 = vector.extract_strided_slice %355 {offsets = [0, 80], sizes = [16, 16], strides = [1, 1]} : vector<16x192xf32> to vector<16x16xf32>
    %c0_102 = arith.constant 0 : index
    %362 = memref.load %arg1[%c0_102] : memref<12xf32, #tpu.memory_space<smem>>
    %363 = vector.broadcast %362 : f32 to vector<16x16xf32>
    %364 = arith.mulf %363, %356 : vector<16x16xf32>
    %c1_103 = arith.constant 1 : index
    %365 = memref.load %arg1[%c1_103] : memref<12xf32, #tpu.memory_space<smem>>
    %366 = vector.broadcast %365 : f32 to vector<16x16xf32>
    %367 = arith.mulf %366, %357 : vector<16x16xf32>
    %368 = arith.addf %364, %367 : vector<16x16xf32>
    %c2_104 = arith.constant 2 : index
    %369 = memref.load %arg1[%c2_104] : memref<12xf32, #tpu.memory_space<smem>>
    %370 = vector.broadcast %369 : f32 to vector<16x16xf32>
    %371 = arith.mulf %370, %358 : vector<16x16xf32>
    %372 = arith.addf %368, %371 : vector<16x16xf32>
    %c3_105 = arith.constant 3 : index
    %373 = memref.load %arg1[%c3_105] : memref<12xf32, #tpu.memory_space<smem>>
    %374 = vector.broadcast %373 : f32 to vector<16x16xf32>
    %375 = arith.mulf %374, %359 : vector<16x16xf32>
    %376 = arith.addf %372, %375 : vector<16x16xf32>
    %c4_106 = arith.constant 4 : index
    %377 = memref.load %arg1[%c4_106] : memref<12xf32, #tpu.memory_space<smem>>
    %378 = vector.broadcast %377 : f32 to vector<16x16xf32>
    %379 = arith.mulf %378, %360 : vector<16x16xf32>
    %380 = arith.addf %376, %379 : vector<16x16xf32>
    %c5_107 = arith.constant 5 : index
    %381 = memref.load %arg1[%c5_107] : memref<12xf32, #tpu.memory_space<smem>>
    %382 = vector.broadcast %381 : f32 to vector<16x16xf32>
    %383 = arith.mulf %382, %361 : vector<16x16xf32>
    %384 = arith.addf %380, %383 : vector<16x16xf32>
    %c6_108 = arith.constant 6 : index
    %385 = memref.load %arg1[%c6_108] : memref<12xf32, #tpu.memory_space<smem>>
    %386 = vector.broadcast %385 : f32 to vector<16x16xf32>
    %387 = arith.mulf %386, %356 : vector<16x16xf32>
    %c7_109 = arith.constant 7 : index
    %388 = memref.load %arg1[%c7_109] : memref<12xf32, #tpu.memory_space<smem>>
    %389 = vector.broadcast %388 : f32 to vector<16x16xf32>
    %390 = arith.mulf %389, %357 : vector<16x16xf32>
    %391 = arith.addf %387, %390 : vector<16x16xf32>
    %c8_110 = arith.constant 8 : index
    %392 = memref.load %arg1[%c8_110] : memref<12xf32, #tpu.memory_space<smem>>
    %393 = vector.broadcast %392 : f32 to vector<16x16xf32>
    %394 = arith.mulf %393, %358 : vector<16x16xf32>
    %395 = arith.addf %391, %394 : vector<16x16xf32>
    %c9_111 = arith.constant 9 : index
    %396 = memref.load %arg1[%c9_111] : memref<12xf32, #tpu.memory_space<smem>>
    %397 = vector.broadcast %396 : f32 to vector<16x16xf32>
    %398 = arith.mulf %397, %359 : vector<16x16xf32>
    %399 = arith.addf %395, %398 : vector<16x16xf32>
    %c10_112 = arith.constant 10 : index
    %400 = memref.load %arg1[%c10_112] : memref<12xf32, #tpu.memory_space<smem>>
    %401 = vector.broadcast %400 : f32 to vector<16x16xf32>
    %402 = arith.mulf %401, %360 : vector<16x16xf32>
    %403 = arith.addf %399, %402 : vector<16x16xf32>
    %c11_113 = arith.constant 11 : index
    %404 = memref.load %arg1[%c11_113] : memref<12xf32, #tpu.memory_space<smem>>
    %405 = vector.broadcast %404 : f32 to vector<16x16xf32>
    %406 = arith.mulf %405, %361 : vector<16x16xf32>
    %407 = arith.addf %403, %406 : vector<16x16xf32>
    %408 = vector.extract_strided_slice %355 {offsets = [0, 96], sizes = [16, 16], strides = [1, 1]} : vector<16x192xf32> to vector<16x16xf32>
    %409 = vector.extract_strided_slice %355 {offsets = [0, 112], sizes = [16, 16], strides = [1, 1]} : vector<16x192xf32> to vector<16x16xf32>
    %410 = vector.extract_strided_slice %355 {offsets = [0, 128], sizes = [16, 16], strides = [1, 1]} : vector<16x192xf32> to vector<16x16xf32>
    %411 = vector.extract_strided_slice %355 {offsets = [0, 144], sizes = [16, 16], strides = [1, 1]} : vector<16x192xf32> to vector<16x16xf32>
    %412 = vector.extract_strided_slice %355 {offsets = [0, 160], sizes = [16, 16], strides = [1, 1]} : vector<16x192xf32> to vector<16x16xf32>
    %413 = vector.extract_strided_slice %355 {offsets = [0, 176], sizes = [16, 16], strides = [1, 1]} : vector<16x192xf32> to vector<16x16xf32>
    %c0_114 = arith.constant 0 : index
    %414 = memref.load %arg1[%c0_114] : memref<12xf32, #tpu.memory_space<smem>>
    %415 = vector.broadcast %414 : f32 to vector<16x16xf32>
    %416 = arith.mulf %415, %408 : vector<16x16xf32>
    %c1_115 = arith.constant 1 : index
    %417 = memref.load %arg1[%c1_115] : memref<12xf32, #tpu.memory_space<smem>>
    %418 = vector.broadcast %417 : f32 to vector<16x16xf32>
    %419 = arith.mulf %418, %409 : vector<16x16xf32>
    %420 = arith.addf %416, %419 : vector<16x16xf32>
    %c2_116 = arith.constant 2 : index
    %421 = memref.load %arg1[%c2_116] : memref<12xf32, #tpu.memory_space<smem>>
    %422 = vector.broadcast %421 : f32 to vector<16x16xf32>
    %423 = arith.mulf %422, %410 : vector<16x16xf32>
    %424 = arith.addf %420, %423 : vector<16x16xf32>
    %c3_117 = arith.constant 3 : index
    %425 = memref.load %arg1[%c3_117] : memref<12xf32, #tpu.memory_space<smem>>
    %426 = vector.broadcast %425 : f32 to vector<16x16xf32>
    %427 = arith.mulf %426, %411 : vector<16x16xf32>
    %428 = arith.addf %424, %427 : vector<16x16xf32>
    %c4_118 = arith.constant 4 : index
    %429 = memref.load %arg1[%c4_118] : memref<12xf32, #tpu.memory_space<smem>>
    %430 = vector.broadcast %429 : f32 to vector<16x16xf32>
    %431 = arith.mulf %430, %412 : vector<16x16xf32>
    %432 = arith.addf %428, %431 : vector<16x16xf32>
    %c5_119 = arith.constant 5 : index
    %433 = memref.load %arg1[%c5_119] : memref<12xf32, #tpu.memory_space<smem>>
    %434 = vector.broadcast %433 : f32 to vector<16x16xf32>
    %435 = arith.mulf %434, %413 : vector<16x16xf32>
    %436 = arith.addf %432, %435 : vector<16x16xf32>
    %c6_120 = arith.constant 6 : index
    %437 = memref.load %arg1[%c6_120] : memref<12xf32, #tpu.memory_space<smem>>
    %438 = vector.broadcast %437 : f32 to vector<16x16xf32>
    %439 = arith.mulf %438, %408 : vector<16x16xf32>
    %c7_121 = arith.constant 7 : index
    %440 = memref.load %arg1[%c7_121] : memref<12xf32, #tpu.memory_space<smem>>
    %441 = vector.broadcast %440 : f32 to vector<16x16xf32>
    %442 = arith.mulf %441, %409 : vector<16x16xf32>
    %443 = arith.addf %439, %442 : vector<16x16xf32>
    %c8_122 = arith.constant 8 : index
    %444 = memref.load %arg1[%c8_122] : memref<12xf32, #tpu.memory_space<smem>>
    %445 = vector.broadcast %444 : f32 to vector<16x16xf32>
    %446 = arith.mulf %445, %410 : vector<16x16xf32>
    %447 = arith.addf %443, %446 : vector<16x16xf32>
    %c9_123 = arith.constant 9 : index
    %448 = memref.load %arg1[%c9_123] : memref<12xf32, #tpu.memory_space<smem>>
    %449 = vector.broadcast %448 : f32 to vector<16x16xf32>
    %450 = arith.mulf %449, %411 : vector<16x16xf32>
    %451 = arith.addf %447, %450 : vector<16x16xf32>
    %c10_124 = arith.constant 10 : index
    %452 = memref.load %arg1[%c10_124] : memref<12xf32, #tpu.memory_space<smem>>
    %453 = vector.broadcast %452 : f32 to vector<16x16xf32>
    %454 = arith.mulf %453, %412 : vector<16x16xf32>
    %455 = arith.addf %451, %454 : vector<16x16xf32>
    %c11_125 = arith.constant 11 : index
    %456 = memref.load %arg1[%c11_125] : memref<12xf32, #tpu.memory_space<smem>>
    %457 = vector.broadcast %456 : f32 to vector<16x16xf32>
    %458 = arith.mulf %457, %413 : vector<16x16xf32>
    %459 = arith.addf %455, %458 : vector<16x16xf32>
    %460 = tpu.concatenate %384, %407, %436, %459 in 1 : vector<16x16xf32>, vector<16x16xf32>, vector<16x16xf32>, vector<16x16xf32> -> vector<16x64xf32>
    %c0_126 = arith.constant 0 : index
    %c0_127 = arith.constant 0 : index
    %c0_128 = arith.constant 0 : index
    %461 = vector.load %arg4[%c0_126, %c0_127, %c0_128] : memref<1x16x64xf32, #tpu.memory_space<vmem>>, vector<1x16x64xf32>
    %462 = vector.shape_cast %461 : vector<1x16x64xf32> to vector<16x64xf32>
    %463 = vector.shape_cast %460 : vector<16x64xf32> to vector<1x16x64xf32>
    tpu.vector_store %arg4[%c0_126, %c0_127, %c0_128], %463 {strides = array<i32>} : memref<1x16x64xf32, #tpu.memory_space<vmem>>, vector<1x16x64xf32>,
    return
  }
  func.func @transform_0(%arg0: i32) -> i32 {
    %c0_i32 = arith.constant 0 : i32
    %c0_i32_0 = arith.constant 0 : i32
    return %c0_i32 : i32
  }
  func.func @transform_1(%arg0: i32) -> (i32, i32) {
    %c0_i32 = arith.constant 0 : i32
    %c0_i32_0 = arith.constant 0 : i32
    %c0_i32_1 = arith.constant 0 : i32
    return %c0_i32, %c0_i32_0 : i32, i32
  }
  func.func @transform_2(%arg0: i32) -> (i32, i32, i32) {
    %c0_i32 = arith.constant 0 : i32
    %c0_i32_0 = arith.constant 0 : i32
    %c0_i32_1 = arith.constant 0 : i32
    return %arg0, %c0_i32, %c0_i32_0 : i32, i32, i32
  }
  func.func @transform_3(%arg0: i32) -> (i32, i32, i32) {
    %c0_i32 = arith.constant 0 : i32
    %c0_i32_0 = arith.constant 0 : i32
    %c0_i32_1 = arith.constant 0 : i32
    return %arg0, %c0_i32, %c0_i32_0 : i32, i32, i32
  }
}

</mosaic_0001>

<llo_original>
// kernel: squeeze.231
$region0: #{squeeze.231}
  %s0 = inlined_call_operand.vmem [shape: f32[2,6], index: 0, kind: input, shape index: {}]
  %s1 = inlined_call_operand.vmem [shape: f32[12], index: 1, kind: output, shape index: {}]
  $region1: #{squeeze.231} parent=0
    #allocation0 [shape = 'u8[4096]{0}', space=vmem, size = 0x1000, scoped, tag = 'scoped mem for output reshape']
    #allocation1 [shape = 'u8[4096]{0}', space=vmem, size = 0x1000, scoped, tag = 'scoped mem for input reshape']
    %s3 = sshll.u32 1, 2
    %s4 = ssub.s32 %s3, 1
    %v5 = vld [vmem:[%s0] sm:%s4]
    %6 = vst [vmem:[#allocation1] sm:%s4] %v5
    %v7 = vld [vmem:[#allocation1] sm:$0x1]
    %vm8 = vcmask 48128
    %9 = vst.msk [vmem:[#allocation0] sm:$0x1] %vm8, %v7
    %s10 = scalar_lea.vmem [#allocation1], 1
    %v11 = vld [vmem:[%s10] sm:$0x1]
    %12 = vrot.lane.b32.xlu0 %v11, 6
    %v13 = vpop.permute.xlu0 %12
    %vm14 = vcmask 97328
    %15 = vst.msk [vmem:[#allocation0] sm:$0x1] %vm14, %v13
    %s17 = sshll.u32 1, 1
    %s18 = ssub.s32 %s17, 1
    %v20 = vld [vmem:[#allocation0] sm:%s18]
    %s21 = sshll.u32 1, 1
    %s22 = ssub.s32 %s21, 1
    %23 = vst [vmem:[%s1] sm:%s22] %v20

</llo_original>
